<compile_context>
chip_gen: v6e
topology: v6e:2x2x1
jax: 0.10.0
libtpu: 0.0.40
codegen_flags: <defaults>
</compile_context>

<pallas_src>
import jax
import jax.numpy as jnp
import jax.scipy.linalg as jsl
from jax import lax
from jax.experimental import pallas as pl
from jax.experimental.pallas import tpu as pltpu

_LANE = 128
_SUBLANE = 8
_TARGET_TILE_BYTES = 8 * 1024 * 1024    # ~8 MiB of x per grid step
_VMEM_LIMIT_BYTES = 48 * 1024 * 1024    # safe on v5e/v6e (128 MiB) and v7x (64 MiB)
_VPU_MAX_C = 8                          # VPU/MXU crossover (keeps v7x mem-bound)


def _round_up(a, b):
    return -(-a // b) * b


# ---------------------------------------------------------------------------
# Kernels
# ---------------------------------------------------------------------------

def _conv1x1_vpu4d_kernel(x_ref, w_ref, o_ref):
    """Small-C path, 4-D layout.  x_ref/o_ref: (C, S_tile, 128); w_ref: (C, C) SMEM.

    z[co] = sum_ci w[co, ci] * x[ci]  as scalar-splat FMAs over full
    (S_tile, 128) vregs -> full sublane utilization even for C=4, and the
    per-term broadcast is a cheap sreg->vreg splat instead of an XLU sublane
    broadcast.  VMEM re-loads of x slices ride the 3 vld slots/cycle and are
    hidden behind the HBM DMA.
    """
    c = o_ref.shape[0]
    for co in range(c):
        acc = w_ref[co, 0] * x_ref[0]
        for ci in range(1, c):
            acc = acc + w_ref[co, ci] * x_ref[ci]
        o_ref[co] = acc.astype(o_ref.dtype)


def _conv1x1_vpu3d_kernel(x_ref, w_ref, o_ref):
    """Small-C fallback (hw % 128 != 0).  x_ref/o_ref: (C, T); w_ref: (C, C) VMEM."""
    x = x_ref[...]
    w = w_ref[...]
    c = w.shape[0]
    acc = w[:, 0:1] * x[0:1, :]          # (C,1)*(1,T) broadcast FMA
    for ci in range(1, c):
        acc = acc + w[:, ci:ci + 1] * x[ci:ci + 1, :]
    o_ref[...] = acc.astype(o_ref.dtype)


def _conv1x1_mxu_kernel(x_ref, w_ref, o_ref):
    """Larger-C path: z = w @ x on the MXU, f32 accumulation."""
    o_ref[...] = jnp.dot(
        w_ref[...], x_ref[...], preferred_element_type=jnp.float32
    ).astype(o_ref.dtype)


# ---------------------------------------------------------------------------
# pallas_call wrappers
# ---------------------------------------------------------------------------

def _compiler_params():
    return pltpu.CompilerParams(
        dimension_semantics=("parallel", "parallel"),
        vmem_limit_bytes=_VMEM_LIMIT_BYTES,
    )


def _conv1x1_small_c(x4, w):
    """C <= _VPU_MAX_C and hw % 128 == 0.  x4: (B, C, S, 128)."""
    B, C, S, _ = x4.shape
    row_bytes = C * _LANE * 4            # x bytes per unit of S in one tile

    if S <= _SUBLANE or S * row_bytes <= _TARGET_TILE_BYTES:
        s_tile = S                       # whole spatial extent (always a legal block)
    else:
        s_tile = max(
            _SUBLANE,
            min((_TARGET_TILE_BYTES // row_bytes) // _SUBLANE * _SUBLANE,
                (S // _SUBLANE) * _SUBLANE),
        )
    n_tiles = pl.cdiv(S, s_tile)
    if B * n_tiles < 2 and S >= 2 * _SUBLANE:
        # keep >= 2 grid steps so both v7x TensorCores get work
        s_tile = _round_up(pl.cdiv(S, 2), _SUBLANE)
        n_tiles = pl.cdiv(S, s_tile)

    return pl.pallas_call(
        _conv1x1_vpu4d_kernel,
        out_shape=jax.ShapeDtypeStruct((B, C, S, _LANE), x4.dtype),
        grid_spec=pltpu.PrefetchScalarGridSpec(
            num_scalar_prefetch=0,
            grid=(B, n_tiles),                       # partial last S block is masked
            in_specs=[
                pl.BlockSpec((pl.Squeezed(), C, s_tile, _LANE),
                             lambda b, t: (b, 0, t, 0)),
                pl.BlockSpec(memory_space=pltpu.MemorySpace.SMEM),   # w scalars
            ],
            out_specs=pl.BlockSpec((pl.Squeezed(), C, s_tile, _LANE),
                                   lambda b, t: (b, 0, t, 0)),
        ),
        compiler_params=_compiler_params(),
    )(x4, w)


def _conv1x1_generic(x3, w, use_vpu):
    """Generic path (any hw; C > _VPU_MAX_C or hw % 128 != 0).  x3: (B, C, hw)."""
    B, C, hw = x3.shape

    tile_target = max(_LANE, (_TARGET_TILE_BYTES // (4 * C)) // _LANE * _LANE)
    if hw <= tile_target:
        tile_hw = hw                     # whole extent; legal even if hw % 128 != 0
    else:
        tile_hw = tile_target            # multiple of 128; last block masked
    n_tiles = pl.cdiv(hw, tile_hw)
    if B * n_tiles < 2 and hw >= 2 * _LANE:
        tile_hw = _round_up(pl.cdiv(hw, 2), _LANE)
        n_tiles = pl.cdiv(hw, tile_hw)

    kernel = _conv1x1_vpu3d_kernel if use_vpu else _conv1x1_mxu_kernel

    return pl.pallas_call(
        kernel,
        out_shape=jax.ShapeDtypeStruct((B, C, hw), x3.dtype),
        grid_spec=pltpu.PrefetchScalarGridSpec(
            num_scalar_prefetch=0,
            grid=(B, n_tiles),
            in_specs=[
                pl.BlockSpec((pl.Squeezed(), C, tile_hw), lambda b, t: (b, 0, t)),
                pl.BlockSpec((C, C), lambda b, t: (0, 0)),           # w resident (VMEM)
            ],
            out_specs=pl.BlockSpec((pl.Squeezed(), C, tile_hw), lambda b, t: (b, 0, t)),
        ),
        compiler_params=_compiler_params(),
    )(x3, w)


def invertible_1x1_conv_forward(x, p, l, u, sign_s, logs, mask):
    """Forward pass of Invertible1x1Conv (use_lu=True). x is NCHW float32."""
    B, C, H, W = x.shape

    # --- parameter assembly (tiny C x C work, plain JAX glue) ---
    eye = jnp.eye(C, dtype=x.dtype)
    l_full = l * mask + eye
    u_full = u * mask.T + jnp.diag(sign_s * jnp.exp(logs))
    w = (p @ l_full @ u_full).astype(x.dtype)            # (C, C)
    logdet = jnp.sum(logs) * jnp.asarray(H * W, dtype=logs.dtype)

    # --- 1x1 conv: per-pixel channel mix, pixels on the lane axis ---
    hw = H * W
    use_vpu = C <= _VPU_MAX_C

    if use_vpu and hw % _LANE == 0:
        # free NCHW reshape -> full sublane utilization for tiny C
        z = _conv1x1_small_c(x.reshape(B, C, hw // _LANE, _LANE), w)
    else:
        z = _conv1x1_generic(x.reshape(B, C, hw), w, use_vpu)
    return z.reshape(B, C, H, W), logdet


# ---------------------------------------------------------------------------
# Parameter init mirroring the module's __init__ (use_lu=True)
# ---------------------------------------------------------------------------

def init_params(key, channels):
    rand = jax.random.normal(key, (channels, channels), dtype=jnp.float32)
    w0, _ = jnp.linalg.qr(rand)                  # random orthogonal matrix
    p_mat, l_mat, u_mat = jsl.lu(w0)             # PLU decomposition
    s = jnp.diag(u_mat)
    sign_s = jnp.sign(s)
    logs = jnp.log(jnp.abs(s))
    u_param = jnp.triu(u_mat, k=1)
    mask = jnp.tril(jnp.ones((channels, channels), dtype=jnp.float32), -1)
    return dict(
        p=p_mat.astype(jnp.float32),
        l=l_mat.astype(jnp.float32),
        u=u_param.astype(jnp.float32),
        sign_s=sign_s.astype(jnp.float32),
        logs=logs.astype(jnp.float32),
        mask=mask,
    )


if __name__ == "__main__":
    key = jax.random.PRNGKey(0)

    # (B, C, H, W): small-C 4-D VPU path, MXU path, and non-128-divisible path.
    cases = [(2, 4, 16, 16), (2, 32, 16, 16), (2, 4, 10, 10)]

    for idx, (B, C, H, W) in enumerate(cases):
        k_param, k_x = jax.random.split(jax.random.fold_in(key, idx))
        params = init_params(k_param, C)
        x = jax.random.normal(k_x, (B, C, H, W), dtype=jnp.float32)

        z, logdet = invertible_1x1_conv_forward(
            x,
            params["p"], params["l"], params["u"],
            params["sign_s"], params["logs"], params["mask"],
        )
        z = jax.block_until_ready(z)
        logdet = jax.block_until_ready(logdet)

        # Pure-JAX reference of the conv hot path (== F.conv2d with 1x1 kernel).
        eye = jnp.eye(C, dtype=x.dtype)
        l_full = params["l"] * params["mask"] + eye
        u_full = params["u"] * params["mask"].T + jnp.diag(
            params["sign_s"] * jnp.exp(params["logs"])
        )
        w_ref = params["p"] @ l_full @ u_full
        z_ref = jnp.einsum("oc,bchw->bohw", w_ref, x,
                           precision=lax.Precision.HIGHEST)
        logdet_ref = jnp.sum(params["logs"]) * (H * W)

        assert z.shape == (B, C, H, W)
        assert jnp.allclose(z, z_ref, atol=1e-4, rtol=1e-4)
        assert jnp.allclose(logdet, logdet_ref, atol=1e-5, rtol=1e-5)

    print("KERNEL_OK")
</pallas_src>

<mosaic_0001>
module attributes {stable_mosaic.version = 11 : i64} {
  func.func @_conv1x1_vpu4d_kernel(%arg0: i32, %arg1: i32, %arg2: memref<1x4x2x128xf32, #tpu.memory_space<vmem>>, %arg3: memref<4x4xf32, #tpu.memory_space<smem>>, %arg4: memref<1x4x2x128xf32, #tpu.memory_space<vmem>>) attributes {dimension_semantics = [#tpu.dimension_semantics<parallel>, #tpu.dimension_semantics<parallel>], iteration_bounds = array<i64: 2, 1>, scalar_prefetch = 0 : i64, scratch_operands = 0 : i64, tpu.core_type = #tpu.core_type<tc>, window_params = [{transform_indices = @transform_0, window_bounds = array<i64: 1, 4, 2, 128>}, {transform_indices = @transform_1, window_bounds = array<i64: 4, 4>}, {transform_indices = @transform_2, window_bounds = array<i64: 1, 4, 2, 128>}]} {
    %c0 = arith.constant 0 : index
    %c0_0 = arith.constant 0 : index
    %0 = memref.load %arg3[%c0, %c0_0] : memref<4x4xf32, #tpu.memory_space<smem>>
    %c0_1 = arith.constant 0 : index
    %c0_2 = arith.constant 0 : index
    %c0_3 = arith.constant 0 : index
    %c0_4 = arith.constant 0 : index
    %1 = vector.load %arg2[%c0_1, %c0_2, %c0_3, %c0_4] : memref<1x4x2x128xf32, #tpu.memory_space<vmem>>, vector<1x1x2x128xf32>
    %2 = vector.shape_cast %1 : vector<1x1x2x128xf32> to vector<2x128xf32>
    %3 = vector.broadcast %0 : f32 to vector<2x128xf32>
    %4 = arith.mulf %3, %2 : vector<2x128xf32>
    %c0_5 = arith.constant 0 : index
    %c1 = arith.constant 1 : index
    %5 = memref.load %arg3[%c0_5, %c1] : memref<4x4xf32, #tpu.memory_space<smem>>
    %c0_6 = arith.constant 0 : index
    %c1_7 = arith.constant 1 : index
    %c0_8 = arith.constant 0 : index
    %c0_9 = arith.constant 0 : index
    %6 = vector.load %arg2[%c0_6, %c1_7, %c0_8, %c0_9] : memref<1x4x2x128xf32, #tpu.memory_space<vmem>>, vector<1x1x2x128xf32>
    %7 = vector.shape_cast %6 : vector<1x1x2x128xf32> to vector<2x128xf32>
    %8 = vector.broadcast %5 : f32 to vector<2x128xf32>
    %9 = arith.mulf %8, %7 : vector<2x128xf32>
    %10 = arith.addf %4, %9 : vector<2x128xf32>
    %c0_10 = arith.constant 0 : index
    %c2 = arith.constant 2 : index
    %11 = memref.load %arg3[%c0_10, %c2] : memref<4x4xf32, #tpu.memory_space<smem>>
    %c0_11 = arith.constant 0 : index
    %c2_12 = arith.constant 2 : index
    %c0_13 = arith.constant 0 : index
    %c0_14 = arith.constant 0 : index
    %12 = vector.load %arg2[%c0_11, %c2_12, %c0_13, %c0_14] : memref<1x4x2x128xf32, #tpu.memory_space<vmem>>, vector<1x1x2x128xf32>
    %13 = vector.shape_cast %12 : vector<1x1x2x128xf32> to vector<2x128xf32>
    %14 = vector.broadcast %11 : f32 to vector<2x128xf32>
    %15 = arith.mulf %14, %13 : vector<2x128xf32>
    %16 = arith.addf %10, %15 : vector<2x128xf32>
    %c0_15 = arith.constant 0 : index
    %c3 = arith.constant 3 : index
    %17 = memref.load %arg3[%c0_15, %c3] : memref<4x4xf32, #tpu.memory_space<smem>>
    %c0_16 = arith.constant 0 : index
    %c3_17 = arith.constant 3 : index
    %c0_18 = arith.constant 0 : index
    %c0_19 = arith.constant 0 : index
    %18 = vector.load %arg2[%c0_16, %c3_17, %c0_18, %c0_19] : memref<1x4x2x128xf32, #tpu.memory_space<vmem>>, vector<1x1x2x128xf32>
    %19 = vector.shape_cast %18 : vector<1x1x2x128xf32> to vector<2x128xf32>
    %20 = vector.broadcast %17 : f32 to vector<2x128xf32>
    %21 = arith.mulf %20, %19 : vector<2x128xf32>
    %22 = arith.addf %16, %21 : vector<2x128xf32>
    %c0_20 = arith.constant 0 : index
    %c0_21 = arith.constant 0 : index
    %c0_22 = arith.constant 0 : index
    %c0_23 = arith.constant 0 : index
    %23 = vector.load %arg4[%c0_20, %c0_21, %c0_22, %c0_23] : memref<1x4x2x128xf32, #tpu.memory_space<vmem>>, vector<1x1x2x128xf32>
    %24 = vector.shape_cast %23 : vector<1x1x2x128xf32> to vector<2x128xf32>
    %25 = vector.shape_cast %22 : vector<2x128xf32> to vector<1x1x2x128xf32>
    tpu.vector_store %arg4[%c0_20, %c0_21, %c0_22, %c0_23], %25 {strides = array<i32>} : memref<1x4x2x128xf32, #tpu.memory_space<vmem>>, vector<1x1x2x128xf32>,
    %c1_24 = arith.constant 1 : index
    %c0_25 = arith.constant 0 : index
    %26 = memref.load %arg3[%c1_24, %c0_25] : memref<4x4xf32, #tpu.memory_space<smem>>
    %c0_26 = arith.constant 0 : index
    %c0_27 = arith.constant 0 : index
    %c0_28 = arith.constant 0 : index
    %c0_29 = arith.constant 0 : index
    %27 = vector.load %arg2[%c0_26, %c0_27, %c0_28, %c0_29] : memref<1x4x2x128xf32, #tpu.memory_space<vmem>>, vector<1x1x2x128xf32>
    %28 = vector.shape_cast %27 : vector<1x1x2x128xf32> to vector<2x128xf32>
    %29 = vector.broadcast %26 : f32 to vector<2x128xf32>
    %30 = arith.mulf %29, %28 : vector<2x128xf32>
    %c1_30 = arith.constant 1 : index
    %c1_31 = arith.constant 1 : index
    %31 = memref.load %arg3[%c1_30, %c1_31] : memref<4x4xf32, #tpu.memory_space<smem>>
    %c0_32 = arith.constant 0 : index
    %c1_33 = arith.constant 1 : index
    %c0_34 = arith.constant 0 : index
    %c0_35 = arith.constant 0 : index
    %32 = vector.load %arg2[%c0_32, %c1_33, %c0_34, %c0_35] : memref<1x4x2x128xf32, #tpu.memory_space<vmem>>, vector<1x1x2x128xf32>
    %33 = vector.shape_cast %32 : vector<1x1x2x128xf32> to vector<2x128xf32>
    %34 = vector.broadcast %31 : f32 to vector<2x128xf32>
    %35 = arith.mulf %34, %33 : vector<2x128xf32>
    %36 = arith.addf %30, %35 : vector<2x128xf32>
    %c1_36 = arith.constant 1 : index
    %c2_37 = arith.constant 2 : index
    %37 = memref.load %arg3[%c1_36, %c2_37] : memref<4x4xf32, #tpu.memory_space<smem>>
    %c0_38 = arith.constant 0 : index
    %c2_39 = arith.constant 2 : index
    %c0_40 = arith.constant 0 : index
    %c0_41 = arith.constant 0 : index
    %38 = vector.load %arg2[%c0_38, %c2_39, %c0_40, %c0_41] : memref<1x4x2x128xf32, #tpu.memory_space<vmem>>, vector<1x1x2x128xf32>
    %39 = vector.shape_cast %38 : vector<1x1x2x128xf32> to vector<2x128xf32>
    %40 = vector.broadcast %37 : f32 to vector<2x128xf32>
    %41 = arith.mulf %40, %39 : vector<2x128xf32>
    %42 = arith.addf %36, %41 : vector<2x128xf32>
    %c1_42 = arith.constant 1 : index
    %c3_43 = arith.constant 3 : index
    %43 = memref.load %arg3[%c1_42, %c3_43] : memref<4x4xf32, #tpu.memory_space<smem>>
    %c0_44 = arith.constant 0 : index
    %c3_45 = arith.constant 3 : index
    %c0_46 = arith.constant 0 : index
    %c0_47 = arith.constant 0 : index
    %44 = vector.load %arg2[%c0_44, %c3_45, %c0_46, %c0_47] : memref<1x4x2x128xf32, #tpu.memory_space<vmem>>, vector<1x1x2x128xf32>
    %45 = vector.shape_cast %44 : vector<1x1x2x128xf32> to vector<2x128xf32>
    %46 = vector.broadcast %43 : f32 to vector<2x128xf32>
    %47 = arith.mulf %46, %45 : vector<2x128xf32>
    %48 = arith.addf %42, %47 : vector<2x128xf32>
    %c0_48 = arith.constant 0 : index
    %c1_49 = arith.constant 1 : index
    %c0_50 = arith.constant 0 : index
    %c0_51 = arith.constant 0 : index
    %49 = vector.load %arg4[%c0_48, %c1_49, %c0_50, %c0_51] : memref<1x4x2x128xf32, #tpu.memory_space<vmem>>, vector<1x1x2x128xf32>
    %50 = vector.shape_cast %49 : vector<1x1x2x128xf32> to vector<2x128xf32>
    %51 = vector.shape_cast %48 : vector<2x128xf32> to vector<1x1x2x128xf32>
    tpu.vector_store %arg4[%c0_48, %c1_49, %c0_50, %c0_51], %51 {strides = array<i32>} : memref<1x4x2x128xf32, #tpu.memory_space<vmem>>, vector<1x1x2x128xf32>,
    %c2_52 = arith.constant 2 : index
    %c0_53 = arith.constant 0 : index
    %52 = memref.load %arg3[%c2_52, %c0_53] : memref<4x4xf32, #tpu.memory_space<smem>>
    %c0_54 = arith.constant 0 : index
    %c0_55 = arith.constant 0 : index
    %c0_56 = arith.constant 0 : index
    %c0_57 = arith.constant 0 : index
    %53 = vector.load %arg2[%c0_54, %c0_55, %c0_56, %c0_57] : memref<1x4x2x128xf32, #tpu.memory_space<vmem>>, vector<1x1x2x128xf32>
    %54 = vector.shape_cast %53 : vector<1x1x2x128xf32> to vector<2x128xf32>
    %55 = vector.broadcast %52 : f32 to vector<2x128xf32>
    %56 = arith.mulf %55, %54 : vector<2x128xf32>
    %c2_58 = arith.constant 2 : index
    %c1_59 = arith.constant 1 : index
    %57 = memref.load %arg3[%c2_58, %c1_59] : memref<4x4xf32, #tpu.memory_space<smem>>
    %c0_60 = arith.constant 0 : index
    %c1_61 = arith.constant 1 : index
    %c0_62 = arith.constant 0 : index
    %c0_63 = arith.constant 0 : index
    %58 = vector.load %arg2[%c0_60, %c1_61, %c0_62, %c0_63] : memref<1x4x2x128xf32, #tpu.memory_space<vmem>>, vector<1x1x2x128xf32>
    %59 = vector.shape_cast %58 : vector<1x1x2x128xf32> to vector<2x128xf32>
    %60 = vector.broadcast %57 : f32 to vector<2x128xf32>
    %61 = arith.mulf %60, %59 : vector<2x128xf32>
    %62 = arith.addf %56, %61 : vector<2x128xf32>
    %c2_64 = arith.constant 2 : index
    %c2_65 = arith.constant 2 : index
    %63 = memref.load %arg3[%c2_64, %c2_65] : memref<4x4xf32, #tpu.memory_space<smem>>
    %c0_66 = arith.constant 0 : index
    %c2_67 = arith.constant 2 : index
    %c0_68 = arith.constant 0 : index
    %c0_69 = arith.constant 0 : index
    %64 = vector.load %arg2[%c0_66, %c2_67, %c0_68, %c0_69] : memref<1x4x2x128xf32, #tpu.memory_space<vmem>>, vector<1x1x2x128xf32>
    %65 = vector.shape_cast %64 : vector<1x1x2x128xf32> to vector<2x128xf32>
    %66 = vector.broadcast %63 : f32 to vector<2x128xf32>
    %67 = arith.mulf %66, %65 : vector<2x128xf32>
    %68 = arith.addf %62, %67 : vector<2x128xf32>
    %c2_70 = arith.constant 2 : index
    %c3_71 = arith.constant 3 : index
    %69 = memref.load %arg3[%c2_70, %c3_71] : memref<4x4xf32, #tpu.memory_space<smem>>
    %c0_72 = arith.constant 0 : index
    %c3_73 = arith.constant 3 : index
    %c0_74 = arith.constant 0 : index
    %c0_75 = arith.constant 0 : index
    %70 = vector.load %arg2[%c0_72, %c3_73, %c0_74, %c0_75] : memref<1x4x2x128xf32, #tpu.memory_space<vmem>>, vector<1x1x2x128xf32>
    %71 = vector.shape_cast %70 : vector<1x1x2x128xf32> to vector<2x128xf32>
    %72 = vector.broadcast %69 : f32 to vector<2x128xf32>
    %73 = arith.mulf %72, %71 : vector<2x128xf32>
    %74 = arith.addf %68, %73 : vector<2x128xf32>
    %c0_76 = arith.constant 0 : index
    %c2_77 = arith.constant 2 : index
    %c0_78 = arith.constant 0 : index
    %c0_79 = arith.constant 0 : index
    %75 = vector.load %arg4[%c0_76, %c2_77, %c0_78, %c0_79] : memref<1x4x2x128xf32, #tpu.memory_space<vmem>>, vector<1x1x2x128xf32>
    %76 = vector.shape_cast %75 : vector<1x1x2x128xf32> to vector<2x128xf32>
    %77 = vector.shape_cast %74 : vector<2x128xf32> to vector<1x1x2x128xf32>
    tpu.vector_store %arg4[%c0_76, %c2_77, %c0_78, %c0_79], %77 {strides = array<i32>} : memref<1x4x2x128xf32, #tpu.memory_space<vmem>>, vector<1x1x2x128xf32>,
    %c3_80 = arith.constant 3 : index
    %c0_81 = arith.constant 0 : index
    %78 = memref.load %arg3[%c3_80, %c0_81] : memref<4x4xf32, #tpu.memory_space<smem>>
    %c0_82 = arith.constant 0 : index
    %c0_83 = arith.constant 0 : index
    %c0_84 = arith.constant 0 : index
    %c0_85 = arith.constant 0 : index
    %79 = vector.load %arg2[%c0_82, %c0_83, %c0_84, %c0_85] : memref<1x4x2x128xf32, #tpu.memory_space<vmem>>, vector<1x1x2x128xf32>
    %80 = vector.shape_cast %79 : vector<1x1x2x128xf32> to vector<2x128xf32>
    %81 = vector.broadcast %78 : f32 to vector<2x128xf32>
    %82 = arith.mulf %81, %80 : vector<2x128xf32>
    %c3_86 = arith.constant 3 : index
    %c1_87 = arith.constant 1 : index
    %83 = memref.load %arg3[%c3_86, %c1_87] : memref<4x4xf32, #tpu.memory_space<smem>>
    %c0_88 = arith.constant 0 : index
    %c1_89 = arith.constant 1 : index
    %c0_90 = arith.constant 0 : index
    %c0_91 = arith.constant 0 : index
    %84 = vector.load %arg2[%c0_88, %c1_89, %c0_90, %c0_91] : memref<1x4x2x128xf32, #tpu.memory_space<vmem>>, vector<1x1x2x128xf32>
    %85 = vector.shape_cast %84 : vector<1x1x2x128xf32> to vector<2x128xf32>
    %86 = vector.broadcast %83 : f32 to vector<2x128xf32>
    %87 = arith.mulf %86, %85 : vector<2x128xf32>
    %88 = arith.addf %82, %87 : vector<2x128xf32>
    %c3_92 = arith.constant 3 : index
    %c2_93 = arith.constant 2 : index
    %89 = memref.load %arg3[%c3_92, %c2_93] : memref<4x4xf32, #tpu.memory_space<smem>>
    %c0_94 = arith.constant 0 : index
    %c2_95 = arith.constant 2 : index
    %c0_96 = arith.constant 0 : index
    %c0_97 = arith.constant 0 : index
    %90 = vector.load %arg2[%c0_94, %c2_95, %c0_96, %c0_97] : memref<1x4x2x128xf32, #tpu.memory_space<vmem>>, vector<1x1x2x128xf32>
    %91 = vector.shape_cast %90 : vector<1x1x2x128xf32> to vector<2x128xf32>
    %92 = vector.broadcast %89 : f32 to vector<2x128xf32>
    %93 = arith.mulf %92, %91 : vector<2x128xf32>
    %94 = arith.addf %88, %93 : vector<2x128xf32>
    %c3_98 = arith.constant 3 : index
    %c3_99 = arith.constant 3 : index
    %95 = memref.load %arg3[%c3_98, %c3_99] : memref<4x4xf32, #tpu.memory_space<smem>>
    %c0_100 = arith.constant 0 : index
    %c3_101 = arith.constant 3 : index
    %c0_102 = arith.constant 0 : index
    %c0_103 = arith.constant 0 : index
    %96 = vector.load %arg2[%c0_100, %c3_101, %c0_102, %c0_103] : memref<1x4x2x128xf32, #tpu.memory_space<vmem>>, vector<1x1x2x128xf32>
    %97 = vector.shape_cast %96 : vector<1x1x2x128xf32> to vector<2x128xf32>
    %98 = vector.broadcast %95 : f32 to vector<2x128xf32>
    %99 = arith.mulf %98, %97 : vector<2x128xf32>
    %100 = arith.addf %94, %99 : vector<2x128xf32>
    %c0_104 = arith.constant 0 : index
    %c3_105 = arith.constant 3 : index
    %c0_106 = arith.constant 0 : index
    %c0_107 = arith.constant 0 : index
    %101 = vector.load %arg4[%c0_104, %c3_105, %c0_106, %c0_107] : memref<1x4x2x128xf32, #tpu.memory_space<vmem>>, vector<1x1x2x128xf32>
    %102 = vector.shape_cast %101 : vector<1x1x2x128xf32> to vector<2x128xf32>
    %103 = vector.shape_cast %100 : vector<2x128xf32> to vector<1x1x2x128xf32>
    tpu.vector_store %arg4[%c0_104, %c3_105, %c0_106, %c0_107], %103 {strides = array<i32>} : memref<1x4x2x128xf32, #tpu.memory_space<vmem>>, vector<1x1x2x128xf32>,
    return
  }
  func.func @transform_0(%arg0: i32, %arg1: i32) -> (i32, i32, i32, i32) {
    %c0_i32 = arith.constant 0 : i32
    %c0_i32_0 = arith.constant 0 : i32
    %c0_i32_1 = arith.constant 0 : i32
    return %arg0, %c0_i32, %arg1, %c0_i32_0 : i32, i32, i32, i32
  }
  func.func @transform_1(%arg0: i32, %arg1: i32) -> (i32, i32) {
    %c0_i32 = arith.constant 0 : i32
    %c0_i32_0 = arith.constant 0 : i32
    %c0_i32_1 = arith.constant 0 : i32
    return %c0_i32, %c0_i32_0 : i32, i32
  }
  func.func @transform_2(%arg0: i32, %arg1: i32) -> (i32, i32, i32, i32) {
    %c0_i32 = arith.constant 0 : i32
    %c0_i32_0 = arith.constant 0 : i32
    %c0_i32_1 = arith.constant 0 : i32
    return %arg0, %c0_i32, %arg1, %c0_i32_0 : i32, i32, i32, i32
  }
}

</mosaic_0001>

<llo_original>
// kernel: tpu_custom_call.1
$region0: #{tpu_custom_call.1}
  #allocation0 [shape = 'u32[]', space=smem, size = 0x4, offset = 0x4, fixed_abs, tag = 'smem constant byte address 0x4 - core index']
  #allocation1 [shape = 'u32[144,128]{1,0:T(1,128)}', space=vmem, size = 0x12000, scoped, tag = 'internal scratch']
  %s0 = inlined_call_operand.hbm [shape: f32[2,4,2,128], index: 0, kind: input, shape index: {}]
  %s1 = inlined_call_operand.hbm [shape: f32[4,4], index: 1, kind: input, shape index: {}]
  %s2 = inlined_call_operand.hbm [shape: f32[2,4,2,128], index: 2, kind: output, shape index: {}]
  %s3 = sld [smem:[#allocation0]]
  $region49: #{tpu_custom_call.1} parent=0
    _
  %s5 = ssub.s32 1, %s3
  %s6 = scalar_select 0, %s5, %s3
  $region1: #{tpu_custom_call.1} parent=0
    #allocation2 [shape = 'u8[8192]{0}', space=vmem, size = 0x2000, scoped, tag = 'input window, operand 0']
    #allocation3 [shape = 's32[2]{0}', space=sflag, size = 0x8, scoped, tag = 'scoped memory for tpu_custom_call.1']
    #allocation4 [shape = 's32[2]{0}', space=sflag, size = 0x8, scoped, tag = 'scoped memory for tpu_custom_call.1']
    #allocation5 [shape = 's32[2]{0}', space=sflag, size = 0x8, scoped, tag = 'scoped memory for tpu_custom_call.1']
    #allocation6 [shape = 'u8[2048]{0}', space=smem, size = 0x800, scoped, tag = 'input window, operand 1, single buffered']
    #allocation7 [shape = 'u8[8192]{0}', space=vmem, size = 0x2000, scoped, tag = 'output window, operand 0']
    %7 = vsyncpa [#allocation3], 0
    %s8 = scalar_lea.sflag [#allocation3], 1
    %9 = vsyncpa %s8, 0
    %10 = vsyncpa [#allocation5], 0
    %11 = vsyncpa [#allocation4], 0
    %s12 = scalar_lea.sflag [#allocation4], 1
    %13 = vsyncpa %s12, 0
    loop: start=0, step=1, limit=4
    $region2: #{tpu_custom_call.1} parent=1 // loop_pre_header
      _
    $region3: #{tpu_custom_call.1} parent=1 // loop_header
      %s15 = sphi 0, %s19
      %p16 = scmp.ge.s32.totalorder %s15, 4
      %s22 = sphi 0, %s34
      %s23 = sphi 0, %s30
      %s24 = sphi 0, %s22
      %s25 = sphi 0, %s23
      %s26 = sphi 0, %s24
      %s27 = sphi 0, %s25
      %s39 = sphi 0, %s41
      %s42 = sphi 0, %s39
      %s43 = sphi 0, %s42
      %s59 = sphi 0, %s43
      %s63 = sphi 0, %s63
      %s65 = sphi 0, %s63
      %s66 = sphi 0, %s65
      %s80 = sphi 0, %s66
      %s88 = sphi 0, %s90
      %s91 = sphi 0, %s88
      %s92 = sphi 0, %s91
      %s108 = sphi 0, %s92
    $region4: #{tpu_custom_call.1} parent=1 // loop_header_branch
      %18 = sbr.rel (%p16) target = $region8
    $region5: #{tpu_custom_call.1} parent=1 // loop_body
      %s20 = ssub.s32 %s15, 1
      %s21 = ssub.s32 %s15, 2
      %s28 = sadd.s32 1, %s23
      %p29 = scmp.ge.s32.totalorder %s28, 1
      %s30 = scalar_select %p29, 0, %s28
      %s31 = sadd.s32 1, %s22
      %s32 = scalar_select %p29, %s31, %s22
      %p33 = scmp.ge.s32.totalorder %s32, 2
      %s34 = scalar_select %p33, 0, %s32
      %s35 = ssub.s32 %s22, %s34
      %s36 = ssub.s32 %s23, %s30
      %s37 = sor.u32 %s35, %s36
      %p38 = scmp.eq.s32.totalorder %s37, 0
      %s40 = sadd.s32 %s39, 1
      %s41 = scalar_select %p38, %s39, %s40
      %p44 = pneg %p38
      %p45 = scmp.eq.s32.totalorder %s15, 1
      %p46 = por %p44, %p45
      %p47 = scmp.ne.s32.totalorder %s39, %s42
      %p48 = scmp.eq.s32.totalorder %s15, 0
      %p49 = por %p47, %p48
      %p50 = scmp.ne.s32.totalorder %s39, %s42
      %p51 = scmp.eq.s32.totalorder %s20, 1
      %p52 = por %p50, %p51
      %p53 = scmp.ne.s32.totalorder %s42, %s43
      %p54 = scmp.eq.s32.totalorder %s20, 0
      %p55 = por %p53, %p54
      %p56 = scmp.ne.s32.totalorder %s42, %s43
      %p57 = scmp.eq.s32.totalorder %s21, 1
      %p58 = por %p56, %p57
      %p60 = scmp.ne.s32.totalorder %s43, %s59
      %p61 = scmp.eq.s32.totalorder %s21, 0
      %p62 = por %p60, %p61
      %s64 = sadd.s32 %s63, 1
      %p67 = scmp.eq.s32.totalorder %s15, 1
      %p68 = scmp.ne.s32.totalorder %s63, %s65
      %p69 = scmp.eq.s32.totalorder %s15, 0
      %p70 = por %p68, %p69
      %p71 = scmp.ne.s32.totalorder %s63, %s65
      %p72 = scmp.eq.s32.totalorder %s20, 1
      %p73 = por %p71, %p72
      %p74 = scmp.ne.s32.totalorder %s65, %s66
      %p75 = scmp.eq.s32.totalorder %s20, 0
      %p76 = por %p74, %p75
      %p77 = scmp.ne.s32.totalorder %s65, %s66
      %p78 = scmp.eq.s32.totalorder %s21, 1
      %p79 = por %p77, %p78
      %p81 = scmp.ne.s32.totalorder %s66, %s80
      %p82 = scmp.eq.s32.totalorder %s21, 0
      %p83 = por %p81, %p82
      %s84 = ssub.s32 %s22, %s34
      %s85 = ssub.s32 %s23, %s30
      %s86 = sor.u32 %s84, %s85
      %p87 = scmp.eq.s32.totalorder %s86, 0
      %s89 = sadd.s32 %s88, 1
      %s90 = scalar_select %p87, %s88, %s89
      %p93 = pneg %p87
      %p94 = scmp.eq.s32.totalorder %s15, 1
      %p95 = por %p93, %p94
      %p96 = scmp.ne.s32.totalorder %s88, %s91
      %p97 = scmp.eq.s32.totalorder %s15, 0
      %p98 = por %p96, %p97
      %p99 = scmp.ne.s32.totalorder %s88, %s91
      %p100 = scmp.eq.s32.totalorder %s20, 1
      %p101 = por %p99, %p100
      %p102 = scmp.ne.s32.totalorder %s91, %s92
      %p103 = scmp.eq.s32.totalorder %s20, 0
      %p104 = por %p102, %p103
      %p105 = scmp.ne.s32.totalorder %s91, %s92
      %p106 = scmp.eq.s32.totalorder %s21, 1
      %p107 = por %p105, %p106
      %p109 = scmp.ne.s32.totalorder %s92, %s108
      %p110 = scmp.eq.s32.totalorder %s21, 0
      %p111 = por %p109, %p110
      %p112 = scmp.le.s32.totalorder 1, %s15
      %p113 = scmp.lt.s32.totalorder %s15, 3
      %p114 = pnand %p112, %p113
      %p115 = pneg %p114
      // Predicated region
      $region9: #{tpu_custom_call.1} parent=5 // pred_check
        _
      $region10: #{tpu_custom_call.1} parent=5 // pred_check_branch
        %117 = sbr.rel (%p114) target = $region12
      $region11: #{tpu_custom_call.1} parent=5 // pred_region
        %s118 = ssub.s32 %s15, 1
        // Predicated region
        $region13: #{tpu_custom_call.1} parent=11 // pred_check
          %p119 = pneg %p76
        $region14: #{tpu_custom_call.1} parent=11 // pred_check_branch
          %121 = sbr.rel (%p119) target = $region16
        $region15: #{tpu_custom_call.1} parent=11 // pred_region
          %s123 = ssub.s32 64, 64
          %124 = vsyncadd [#allocation5], %s123
          %127 = dma.hbm_to_smem %s1, 64, [#allocation6], [#allocation5]
        $region16: #{tpu_custom_call.1} parent=11 // pred_fallthru
          _
      $region12: #{tpu_custom_call.1} parent=5 // pred_fallthru
        _
      %p128 = scmp.lt.s32.totalorder %s15, 2
      // Predicated region
      $region17: #{tpu_custom_call.1} parent=5 // pred_check
        %p129 = pneg %p128
      $region18: #{tpu_custom_call.1} parent=5 // pred_check_branch
        %131 = sbr.rel (%p129) target = $region20
      $region19: #{tpu_custom_call.1} parent=5 // pred_region
        // Predicated region
        $region21: #{tpu_custom_call.1} parent=19 // pred_check
          %p132 = pneg %p49
        $region22: #{tpu_custom_call.1} parent=19 // pred_check_branch
          %134 = sbr.rel (%p132) target = $region24
        $region23: #{tpu_custom_call.1} parent=19 // pred_region
          %s135 = sand.u32 %s39, 1
          %s136 = scalar_lea.sflag [#allocation3], %s135
          %s137 = sand.u32 %s39, 1
          %s138 = smul.addr %s137, 8
          %s139 = scalar_lea.vmem [#allocation2], %s138
          %s141 = ssub.s32 128, 128
          %142 = vsyncadd %s136, %s141
          %s143 = smul.addr %s22, 4
          %s144 = sadd.s32 %s23, %s143
          %s145 = smul.addr %s144, 32
          %s146 = scalar_lea.hbm %s0, %s145
          %s147 = sshll.u32 %s139, 4
          %s148 = int_to_ptr.vmem [resolvable:$true] %s147
          %153 = dma.hbm_to_vmem [thread:$0]  %s146, 128, %s148, %s136, 32, 32, 2
        $region24: #{tpu_custom_call.1} parent=19 // pred_fallthru
          _
      $region20: #{tpu_custom_call.1} parent=5 // pred_fallthru
        _
      %p154 = scmp.le.s32.totalorder 1, %s15
      %p155 = scmp.lt.s32.totalorder %s15, 3
      %p156 = pnand %p154, %p155
      %p157 = pneg %p156
      // Predicated region
      $region25: #{tpu_custom_call.1} parent=5 // pred_check
        _
      $region26: #{tpu_custom_call.1} parent=5 // pred_check_branch
        %159 = sbr.rel (%p156) target = $region28
      $region27: #{tpu_custom_call.1} parent=5 // pred_region
        %s160 = ssub.s32 %s15, 1
        %s161 = sand.u32 %s42, 1
        %s162 = scalar_lea.sflag [#allocation3], %s161
        %s163 = sand.u32 %s42, 1
        %s164 = smul.addr %s163, 8
        %s165 = scalar_lea.vmem [#allocation2], %s164
        // Predicated region
        $region29: #{tpu_custom_call.1} parent=27 // pred_check
          %p166 = pneg %p55
        $region30: #{tpu_custom_call.1} parent=27 // pred_check_branch
          %168 = sbr.rel (%p166) target = $region32
        $region31: #{tpu_custom_call.1} parent=27 // pred_region
          %169 = dma.done %s162, 128
        $region32: #{tpu_custom_call.1} parent=27 // pred_fallthru
          _
        // Predicated region
        $region33: #{tpu_custom_call.1} parent=27 // pred_check
          %p170 = pneg %p76
        $region34: #{tpu_custom_call.1} parent=27 // pred_check_branch
          %172 = sbr.rel (%p170) target = $region36
        $region35: #{tpu_custom_call.1} parent=27 // pred_region
          %173 = dma.done [#allocation5], 64
        $region36: #{tpu_custom_call.1} parent=27 // pred_fallthru
          _
        %174 = sfence
        %s175 = sand.u32 %s42, 1
        %s176 = scalar_lea.sflag [#allocation3], %s175
        %s177 = sand.u32 %s42, 1
        %s178 = smul.addr %s177, 8
        %s179 = scalar_lea.vmem [#allocation2], %s178
        %p180 = pneg %p55
        %p181 = pneg %p52
        %p182 = pneg %p76
        %p183 = pneg %p73
        %p184 = pneg %p104
        %p185 = pneg %p101
        %s186 = sand.u32 %s91, 1
        %s187 = scalar_lea.sflag [#allocation4], %s186
        %s188 = sand.u32 %s91, 1
        %s189 = smul.addr %s188, 8
        %s190 = scalar_lea.vmem [#allocation7], %s189
        %s191 = sld [smem:[#allocation6]]
        %v192 = vld [vmem:[%s165] sm:$0x3]
        %v193 = vstv %s191
        %v194 = vmul.f32 %v193, %v192
        %s195 = sld [smem:[#allocation6 + $0x1]]
        %s196 = scalar_lea.vmem %s165, 2 [#allocation2]
        %v197 = vld [vmem:[%s196] sm:$0x3]
        %v198 = vstv %s195
        %v199 = vmul.f32 %v198, %v197
        %v200 = vadd.f32 %v194, %v199
        %s201 = sld [smem:[#allocation6 + $0x2]]
        %s202 = scalar_lea.vmem %s165, 4 [#allocation2]
        %v203 = vld [vmem:[%s202] sm:$0x3]
        %v204 = vstv %s201
        %v205 = vmul.f32 %v204, %v203
        %v206 = vadd.f32 %v200, %v205
        %s207 = sld [smem:[#allocation6 + $0x3]]
        %s208 = scalar_lea.vmem %s165, 6 [#allocation2]
        %v209 = vld [vmem:[%s208] sm:$0x3]
        %v210 = vstv %s207
        %v211 = vmul.f32 %v210, %v209
        %v212 = vadd.f32 %v206, %v211
        %213 = vst [vmem:[%s190] sm:$0x3] %v212
        %s214 = sld [smem:[#allocation6 + $0x80]]
        %v215 = vld [vmem:[%s165] sm:$0x3]
        %v216 = vstv %s214
        %v217 = vmul.f32 %v216, %v215
        %s218 = sld [smem:[#allocation6 + $0x81]]
        %v219 = vld [vmem:[%s196] sm:$0x3]
        %v220 = vstv %s218
        %v221 = vmul.f32 %v220, %v219
        %v222 = vadd.f32 %v217, %v221
        %s223 = sld [smem:[#allocation6 + $0x82]]
        %v224 = vld [vmem:[%s202] sm:$0x3]
        %v225 = vstv %s223
        %v226 = vmul.f32 %v225, %v224
        %v227 = vadd.f32 %v222, %v226
        %s228 = sld [smem:[#allocation6 + $0x83]]
        %v229 = vld [vmem:[%s208] sm:$0x3]
        %v230 = vstv %s228
        %v231 = vmul.f32 %v230, %v229
        %v232 = vadd.f32 %v227, %v231
        %s233 = scalar_lea.vmem %s190, 2 [#allocation7]
        %234 = vst [vmem:[%s233] sm:$0x3] %v232
        %s235 = sld [smem:[#allocation6 + $0x100]]
        %v236 = vld [vmem:[%s165] sm:$0x3]
        %v237 = vstv %s235
        %v238 = vmul.f32 %v237, %v236
        %s239 = sld [smem:[#allocation6 + $0x101]]
        %v240 = vld [vmem:[%s196] sm:$0x3]
        %v241 = vstv %s239
        %v242 = vmul.f32 %v241, %v240
        %v243 = vadd.f32 %v238, %v242
        %s244 = sld [smem:[#allocation6 + $0x102]]
        %v245 = vld [vmem:[%s202] sm:$0x3]
        %v246 = vstv %s244
        %v247 = vmul.f32 %v246, %v245
        %v248 = vadd.f32 %v243, %v247
        %s249 = sld [smem:[#allocation6 + $0x103]]
        %v250 = vld [vmem:[%s208] sm:$0x3]
        %v251 = vstv %s249
        %v252 = vmul.f32 %v251, %v250
        %v253 = vadd.f32 %v248, %v252
        %s254 = scalar_lea.vmem %s190, 4 [#allocation7]
        %255 = vst [vmem:[%s254] sm:$0x3] %v253
        %s256 = sld [smem:[#allocation6 + $0x180]]
        %v257 = vld [vmem:[%s165] sm:$0x3]
        %v258 = vstv %s256
        %v259 = vmul.f32 %v258, %v257
        %s260 = sld [smem:[#allocation6 + $0x181]]
        %v261 = vld [vmem:[%s196] sm:$0x3]
        %v262 = vstv %s260
        %v263 = vmul.f32 %v262, %v261
        %v264 = vadd.f32 %v259, %v263
        %s265 = sld [smem:[#allocation6 + $0x182]]
        %v266 = vld [vmem:[%s202] sm:$0x3]
        %v267 = vstv %s265
        %v268 = vmul.f32 %v267, %v266
        %v269 = vadd.f32 %v264, %v268
        %s270 = sld [smem:[#allocation6 + $0x183]]
        %v271 = vld [vmem:[%s208] sm:$0x3]
        %v272 = vstv %s270
        %v273 = vmul.f32 %v272, %v271
        %v274 = vadd.f32 %v269, %v273
        %s275 = scalar_lea.vmem %s190, 6 [#allocation7]
        %276 = vst [vmem:[%s275] sm:$0x3] %v274
        %s277 = sand.u32 %s91, 1
        %s278 = scalar_lea.sflag [#allocation4], %s277
        %s279 = sand.u32 %s91, 1
        %s280 = smul.addr %s279, 8
        %s281 = scalar_lea.vmem [#allocation7], %s280
        // Predicated region
        $region37: #{tpu_custom_call.1} parent=27 // pred_check
          %p282 = pneg %p101
        $region38: #{tpu_custom_call.1} parent=27 // pred_check_branch
          %284 = sbr.rel (%p282) target = $region40
        $region39: #{tpu_custom_call.1} parent=27 // pred_region
          %s286 = ssub.s32 128, 128
          %287 = vsyncadd %s278, %s286
          %s288 = smul.addr %s24, 4
          %s289 = sadd.s32 %s25, %s288
          %s290 = smul.addr %s289, 32
          %s291 = scalar_lea.hbm %s2, %s290
          %s292 = sshll.u32 %s281, 4
          %s293 = int_to_ptr.vmem [resolvable:$true] %s292
          %298 = dma.vmem_to_hbm [thread:$0]  %s293, 128, %s291, %s278, 32, 32, 2
        $region40: #{tpu_custom_call.1} parent=27 // pred_fallthru
          _
      $region28: #{tpu_custom_call.1} parent=5 // pred_fallthru
        _
      %p299 = scmp.le.s32.totalorder 2, %s15
      // Predicated region
      $region41: #{tpu_custom_call.1} parent=5 // pred_check
        %p300 = pneg %p299
      $region42: #{tpu_custom_call.1} parent=5 // pred_check_branch
        %302 = sbr.rel (%p300) target = $region44
      $region43: #{tpu_custom_call.1} parent=5 // pred_region
        %s303 = ssub.s32 %s15, 2
        // Predicated region
        $region45: #{tpu_custom_call.1} parent=43 // pred_check
          %p304 = pneg %p107
        $region46: #{tpu_custom_call.1} parent=43 // pred_check_branch
          %306 = sbr.rel (%p304) target = $region48
        $region47: #{tpu_custom_call.1} parent=43 // pred_region
          %s307 = sand.u32 %s92, 1
          %s308 = scalar_lea.sflag [#allocation4], %s307
          %s309 = sand.u32 %s92, 1
          %s310 = smul.addr %s309, 8
          %s311 = scalar_lea.vmem [#allocation7], %s310
          %312 = dma.done %s308, 128
        $region48: #{tpu_custom_call.1} parent=43 // pred_fallthru
          _
      $region44: #{tpu_custom_call.1} parent=5 // pred_fallthru
        _
    $region6: #{tpu_custom_call.1} parent=1 // loop_footer
      %s19 = sadd.s32 1, %s15
    $region7: #{tpu_custom_call.1} parent=1 // loop_footer_branch
      %14 = sbr.rel target = $region3
    $region8: #{tpu_custom_call.1} parent=1 // loop_exit
      _
    %313 = vsyncpa [#allocation3], 1
    %s314 = scalar_lea.sflag [#allocation3], 1
    %315 = vsyncpa %s314, 1
    %316 = vsyncpa [#allocation4], 1
    %s317 = scalar_lea.sflag [#allocation4], 1
    %318 = vsyncpa %s317, 1
    %319 = vsyncpa [#allocation5], 1
    %s320 = scalar_lea.sflag [#allocation5], 1
    %321 = vsyncpa %s320, 1

</llo_original>
